<compile_context>
chip_gen: v5e
topology: v5e:2x2
jax: 0.10.0
libtpu: 0.0.40
codegen_flags: <defaults>
</compile_context>

<pallas_src>
import jax
import jax.numpy as jnp
from jax import lax
from jax.experimental import pallas as pl
from jax.experimental.pallas import tpu as pltpu

OUT_HEIGHT = 8
OUT_WIDTH = 14
EPS = 1e-5


def _elu(x):
    # ELU with alpha = 1.0 (PyTorch default). exp(x)-1 kept instead of expm1
    # (guaranteed Mosaic lowering); difference is ~1e-8 near zero.
    return jnp.where(x > 0, x, jnp.exp(x) - 1.0)


def ffn_kernel(p_ref, w1_ref, c_ref, o_ref):
    # p_ref  : (9C, MP)   im2col patches; rows = (tap, cin), cols = flat (n,h,w),
    #                     zero-padded to MP (multiple of 128) on the lane axis
    # w1_ref : (C, 9C)    conv1 (3x3) weights with BN1 scale folded in
    # c_ref  : (C, C+4)   merged constants:
    #                       [:, 0:C]     = conv2 (1x1) weights with BN2 scale folded
    #                       [:, C]       = conv1 bias + BN1 shift
    #                       [:, C+1]     = conv2 bias + BN2 shift
    #                       [:, C+2]     = final BN ("ln") scale
    #                       [:, C+3]     = final BN ("ln") shift
    # o_ref  : (C, MP)
    C = w1_ref.shape[0]

    # conv1(3x3, pad=1) + bias + bn1 as one MXU matmul + per-channel shift.
    # p_ref[...] is fed directly to the dot so the full (9C, MP) value is not
    # kept live across both matmuls.
    y = jnp.dot(w1_ref[...], p_ref[...], preferred_element_type=jnp.float32)  # (C, MP)
    y = _elu(y + c_ref[:, C:C + 1])                                            # elu1

    # conv2 (1x1) + bias + bn2
    z = jnp.dot(c_ref[:, 0:C], y, preferred_element_type=jnp.float32)         # (C, MP)
    z = _elu(z + c_ref[:, C + 1:C + 2])                                        # elu2 (k > 0)

    # residual = centre tap (ky=1, kx=1) of the im2col matrix = original input.
    # Re-loaded here (rows 4C:5C are sublane-tile aligned, only 8 vregs).
    r = z + p_ref[4 * C:5 * C, :]
    r = r * c_ref[:, C + 2:C + 3] + c_ref[:, C + 3:C + 4]                      # ln (BN2d, use_ln=False)
    o_ref[...] = r.astype(o_ref.dtype)


def fold_ffn_params(params):
    """Fold conv biases + eval-mode BN into weights / per-channel constants.

    Run ONCE per parameter set (hoisted out of the per-call forward).
    Returns (w1f (C, 9C), consts (C, C+4)).
    """
    (w1_hwio, b1, g1, be1, m1, v1,
     w2_io, b2, g2, be2, m2, v2,
     g3, be3, m3, v3) = params
    C = w1_hwio.shape[2]

    def fold_bn(g, b, m, v):
        s = g / jnp.sqrt(v + EPS)
        return s, b - m * s

    s1, t1 = fold_bn(g1, be1, m1, v1)
    s2, t2 = fold_bn(g2, be2, m2, v2)
    s3, t3 = fold_bn(g3, be3, m3, v3)

    # w1f[cout, tap*C + cin] = w1[ky, kx, cin, cout] * s1[cout], tap = 3*ky + kx
    w1f = jnp.transpose(w1_hwio, (3, 0, 1, 2)).reshape(C, 9 * C) * s1[:, None]
    t1f = (b1 * s1 + t1).reshape(C, 1)
    w2f = w2_io.T * s2[:, None]                               # (Cout, Cin)
    t2f = (b2 * s2 + t2).reshape(C, 1)
    consts = jnp.concatenate(
        [w2f, t1f, t2f, s3.reshape(C, 1), t3.reshape(C, 1)], axis=1)  # (C, C+4)
    return w1f, consts


def ffn_forward(x_nchw, w1f, consts):
    N, C, H, W = x_nchw.shape
    M = N * H * W
    MP = pl.cdiv(M, 128) * 128                                # lane-dense width

    # ---- wrapper-side layout plumbing, staying in NCHW (leading-axis
    #      transposes only, no minor-dim relayout) ----
    xpad = jnp.pad(x_nchw, ((0, 0), (0, 0), (1, 1), (1, 1)))
    taps = [xpad[:, :, ky:ky + H, kx:kx + W]                  # 9 x (N,C,H,W)
            for ky in range(3) for kx in range(3)]
    patches = jnp.stack(taps, axis=0)                         # (9, N, C, H, W)
    patches = jnp.transpose(patches, (0, 2, 1, 3, 4))         # (9, C, N, H, W)
    patches = patches.reshape(9 * C, M)
    patches = jnp.pad(patches, ((0, 0), (0, MP - M)))         # (9C, MP)

    # Grid-less single-shot call: whole arrays in VMEM, no pipeline stage,
    # no per-input double buffering. (~0.6 MiB total, fits any generation.)
    # NOTE: allow_input_fusion for the pad/reshape producer is a possible
    # further tweak; left off to keep lowering conservative.
    vmem = pl.BlockSpec(memory_space=pltpu.MemorySpace.VMEM)
    out2d = pl.pallas_call(
        ffn_kernel,
        out_shape=jax.ShapeDtypeStruct((C, MP), jnp.float32),
        in_specs=[vmem, vmem, vmem],
        out_specs=vmem,
    )(patches, w1f, consts)

    out = out2d[:, :M].reshape(C, N, H, W)
    return jnp.transpose(out, (1, 0, 2, 3))                   # back to NCHW


def ffn_reference(x, params):
    # Pure-JAX reference of the PyTorch forward (eval-mode BN), NCHW.
    (w1_hwio, b1, g1, be1, m1, v1,
     w2_io, b2, g2, be2, m2, v2,
     g3, be3, m3, v3) = params

    def bn(t, g, b, m, v):
        return ((t - m[None, :, None, None])
                / jnp.sqrt(v + EPS)[None, :, None, None]
                * g[None, :, None, None] + b[None, :, None, None])

    y = lax.conv_general_dilated(x, w1_hwio, (1, 1), 'SAME',
                                 dimension_numbers=('NCHW', 'HWIO', 'NCHW'))
    y = y + b1[None, :, None, None]
    y = _elu(bn(y, g1, be1, m1, v1))

    z = lax.conv_general_dilated(y, w2_io[None, None, :, :], (1, 1), 'SAME',
                                 dimension_numbers=('NCHW', 'HWIO', 'NCHW'))
    z = z + b2[None, :, None, None]
    z = _elu(bn(z, g2, be2, m2, v2))

    return bn(z + x, g3, be3, m3, v3)


if __name__ == "__main__":
    N, C, H, W = 2, 32, OUT_HEIGHT, OUT_WIDTH       # num_class = 32 (small)
    key = jax.random.PRNGKey(0)
    ks = jax.random.split(key, 17)

    w1 = 0.05 * jax.random.normal(ks[0], (3, 3, C, C), jnp.float32)   # HWIO
    b1 = 0.05 * jax.random.normal(ks[1], (C,), jnp.float32)
    g1 = 1.0 + 0.1 * jax.random.normal(ks[2], (C,), jnp.float32)
    be1 = 0.05 * jax.random.normal(ks[3], (C,), jnp.float32)
    m1 = 0.05 * jax.random.normal(ks[4], (C,), jnp.float32)
    v1 = 0.5 + jax.random.uniform(ks[5], (C,), jnp.float32)

    w2 = 0.05 * jax.random.normal(ks[6], (C, C), jnp.float32)         # (Cin, Cout)
    b2 = 0.05 * jax.random.normal(ks[7], (C,), jnp.float32)
    g2 = 1.0 + 0.1 * jax.random.normal(ks[8], (C,), jnp.float32)
    be2 = 0.05 * jax.random.normal(ks[9], (C,), jnp.float32)
    m2 = 0.05 * jax.random.normal(ks[10], (C,), jnp.float32)
    v2 = 0.5 + jax.random.uniform(ks[11], (C,), jnp.float32)

    g3 = 1.0 + 0.1 * jax.random.normal(ks[12], (C,), jnp.float32)
    be3 = 0.05 * jax.random.normal(ks[13], (C,), jnp.float32)
    m3 = 0.05 * jax.random.normal(ks[14], (C,), jnp.float32)
    v3 = 0.5 + jax.random.uniform(ks[15], (C,), jnp.float32)

    x = jax.random.normal(ks[16], (N, C, H, W), jnp.float32)

    params = (w1, b1, g1, be1, m1, v1,
              w2, b2, g2, be2, m2, v2,
              g3, be3, m3, v3)

    # Constant folding runs once, outside the per-call jitted forward.
    w1f, consts = fold_ffn_params(params)
    w1f, consts = jax.block_until_ready((w1f, consts))

    fwd = jax.jit(ffn_forward)
    out = jax.block_until_ready(fwd(x, w1f, consts))
    ref = ffn_reference(x, params)

    assert out.shape == x.shape
    assert jnp.allclose(out, ref, atol=1e-4, rtol=1e-4), \
        f"max abs err = {jnp.max(jnp.abs(out - ref))}"
    print("KERNEL_OK")
</pallas_src>

<mosaic_0001>
module attributes {stable_mosaic.version = 11 : i64} {
  func.func @ffn_kernel(%arg0: memref<288x256xf32, #tpu.memory_space<vmem>>, %arg1: memref<32x288xf32, #tpu.memory_space<vmem>>, %arg2: memref<32x36xf32, #tpu.memory_space<vmem>>, %arg3: memref<32x256xf32, #tpu.memory_space<vmem>>) attributes {dimension_semantics = [], scalar_prefetch = 0 : i64, scratch_operands = 0 : i64, tpu.core_type = #tpu.core_type<tc>} {
    %c0 = arith.constant 0 : index
    %c0_0 = arith.constant 0 : index
    %0 = vector.load %arg1[%c0, %c0_0] : memref<32x288xf32, #tpu.memory_space<vmem>>, vector<32x288xf32>
    %c0_1 = arith.constant 0 : index
    %c0_2 = arith.constant 0 : index
    %1 = vector.load %arg0[%c0_1, %c0_2] : memref<288x256xf32, #tpu.memory_space<vmem>>, vector<288x256xf32>
    %cst = arith.constant dense<0.000000e+00> : vector<32x256xf32>
    %2 = tpu.matmul %0, %1, %cst {dimension_numbers = #tpu.dot_dimension_numbers<[1], [0], [0], [1], [0, 0, 1, 1], [], []>} : vector<32x288xf32>, vector<288x256xf32>, vector<32x256xf32> -> vector<32x256xf32>
    %c0_3 = arith.constant 0 : index
    %c32 = arith.constant 32 : index
    %3 = vector.load %arg2[%c0_3, %c32] : memref<32x36xf32, #tpu.memory_space<vmem>>, vector<32x1xf32>
    %4 = vector.broadcast %3 : vector<32x1xf32> to vector<32x256xf32>
    %5 = arith.addf %2, %4 : vector<32x256xf32>
    %cst_4 = arith.constant 0.000000e+00 : f32
    %6 = vector.broadcast %cst_4 : f32 to vector<32x256xf32>
    %7 = arith.cmpf ogt, %5, %6 : vector<32x256xf32>
    %8 = math.exp %5 : vector<32x256xf32>
    %cst_5 = arith.constant 1.000000e+00 : f32
    %9 = vector.broadcast %cst_5 : f32 to vector<32x256xf32>
    %10 = arith.subf %8, %9 : vector<32x256xf32>
    %11 = arith.select %7, %5, %10 : vector<32x256xi1>, vector<32x256xf32>
    %c0_6 = arith.constant 0 : index
    %c0_7 = arith.constant 0 : index
    %12 = vector.load %arg2[%c0_6, %c0_7] : memref<32x36xf32, #tpu.memory_space<vmem>>, vector<32x32xf32>
    %cst_8 = arith.constant dense<0.000000e+00> : vector<32x256xf32>
    %13 = tpu.matmul %12, %11, %cst_8 {dimension_numbers = #tpu.dot_dimension_numbers<[1], [0], [0], [1], [0, 0, 1, 1], [], []>} : vector<32x32xf32>, vector<32x256xf32>, vector<32x256xf32> -> vector<32x256xf32>
    %c0_9 = arith.constant 0 : index
    %c33 = arith.constant 33 : index
    %14 = vector.load %arg2[%c0_9, %c33] : memref<32x36xf32, #tpu.memory_space<vmem>>, vector<32x1xf32>
    %15 = vector.broadcast %14 : vector<32x1xf32> to vector<32x256xf32>
    %16 = arith.addf %13, %15 : vector<32x256xf32>
    %cst_10 = arith.constant 0.000000e+00 : f32
    %17 = vector.broadcast %cst_10 : f32 to vector<32x256xf32>
    %18 = arith.cmpf ogt, %16, %17 : vector<32x256xf32>
    %19 = math.exp %16 : vector<32x256xf32>
    %cst_11 = arith.constant 1.000000e+00 : f32
    %20 = vector.broadcast %cst_11 : f32 to vector<32x256xf32>
    %21 = arith.subf %19, %20 : vector<32x256xf32>
    %22 = arith.select %18, %16, %21 : vector<32x256xi1>, vector<32x256xf32>
    %c128 = arith.constant 128 : index
    %c0_12 = arith.constant 0 : index
    %23 = vector.load %arg0[%c128, %c0_12] : memref<288x256xf32, #tpu.memory_space<vmem>>, vector<32x256xf32>
    %24 = arith.addf %22, %23 : vector<32x256xf32>
    %c0_13 = arith.constant 0 : index
    %c34 = arith.constant 34 : index
    %25 = vector.load %arg2[%c0_13, %c34] : memref<32x36xf32, #tpu.memory_space<vmem>>, vector<32x1xf32>
    %26 = vector.broadcast %25 : vector<32x1xf32> to vector<32x256xf32>
    %27 = arith.mulf %24, %26 : vector<32x256xf32>
    %c0_14 = arith.constant 0 : index
    %c35 = arith.constant 35 : index
    %28 = vector.load %arg2[%c0_14, %c35] : memref<32x36xf32, #tpu.memory_space<vmem>>, vector<32x1xf32>
    %29 = vector.broadcast %28 : vector<32x1xf32> to vector<32x256xf32>
    %30 = arith.addf %27, %29 : vector<32x256xf32>
    %c0_15 = arith.constant 0 : index
    %c0_16 = arith.constant 0 : index
    %31 = vector.load %arg3[%c0_15, %c0_16] : memref<32x256xf32, #tpu.memory_space<vmem>>, vector<32x256xf32>
    tpu.vector_store %arg3[%c0_15, %c0_16], %30 {strides = array<i32>} : memref<32x256xf32, #tpu.memory_space<vmem>>, vector<32x256xf32>,
    return
  }
}

</mosaic_0001>

<llo_original>
// kernel: ffn_forward.1
$region0: #{ffn_forward.1}
  #allocation0 [shape = 'u32[]', space=smem, size = 0x4, offset = 0x4, fixed_abs, tag = 'smem constant byte address 0x4 - core index']
  #allocation1 [shape = 'u32[72,128]{1,0:T(1,128)}', space=vmem, size = 0x9000, scoped, tag = 'internal scratch']
  %s0 = inlined_call_operand.vmem [shape: f32[288,256], index: 0, kind: input, shape index: {}]
  %s1 = inlined_call_operand.vmem [shape: f32[32,288], index: 1, kind: input, shape index: {}]
  %s2 = inlined_call_operand.vmem [shape: f32[32,36], index: 2, kind: input, shape index: {}]
  %s3 = inlined_call_operand.vmem [shape: f32[32,256], index: 3, kind: output, shape index: {}]
  %s4 = sld [smem:[#allocation0]]
  $region22: #{ffn_forward.1} parent=0
    _
  %s6 = ssub.s32 1, %s4
  %s7 = scalar_select 0, %s6, %s4
  // Predicated region
  $region2: #{ffn_forward.1} parent=0 // pred_check
    _
  $region3: #{ffn_forward.1} parent=0 // pred_check_branch
    %9 = sbr.rel (0) target = $region5
  $region4: #{ffn_forward.1} parent=0 // pred_region
    _
  $region5: #{ffn_forward.1} parent=0 // pred_fallthru
    _
  // Predicated region
  $region6: #{ffn_forward.1} parent=0 // pred_check
    _
  $region7: #{ffn_forward.1} parent=0 // pred_check_branch
    %11 = sbr.rel (0) target = $region9
  $region8: #{ffn_forward.1} parent=0 // pred_region
    _
  $region9: #{ffn_forward.1} parent=0 // pred_fallthru
    _
  // Predicated region
  $region10: #{ffn_forward.1} parent=0 // pred_check
    _
  $region11: #{ffn_forward.1} parent=0 // pred_check_branch
    %13 = sbr.rel (0) target = $region13
  $region12: #{ffn_forward.1} parent=0 // pred_region
    _
  $region13: #{ffn_forward.1} parent=0 // pred_fallthru
    _
  %v14 = vld [vmem:[%s1] sm:$0xff]
  %v15 = vld [vmem:[%s1 + $0x8] sm:$0xff]
  %v16 = vld [vmem:[%s1 + $0x10] sm:$0xff]
  %v17 = vld [vmem:[%s1 + $0x18] sm:$0xff]
  %v18 = vld [vmem:[%s1 + $0x20] sm:$0xff]
  %v19 = vld [vmem:[%s1 + $0x28] sm:$0xff]
  %v20 = vld [vmem:[%s1 + $0x30] sm:$0xff]
  %v21 = vld [vmem:[%s1 + $0x38] sm:$0xff]
  %v22 = vld [vmem:[%s1 + $0x40] sm:$0xff]
  %v23 = vld [vmem:[%s1 + $0x48] sm:$0xff]
  %v24 = vld [vmem:[%s1 + $0x50] sm:$0xff]
  %v25 = vld [vmem:[%s1 + $0x58] sm:$0xff]
  %v26 = vld [vmem:[%s0] sm:$0xff]
  %v27 = vld [vmem:[%s0 + $0x8] sm:$0xff]
  %v28 = vld [vmem:[%s0 + $0x10] sm:$0xff]
  %v29 = vld [vmem:[%s0 + $0x18] sm:$0xff]
  %v30 = vld [vmem:[%s0 + $0x20] sm:$0xff]
  %v31 = vld [vmem:[%s0 + $0x28] sm:$0xff]
  %v32 = vld [vmem:[%s0 + $0x30] sm:$0xff]
  %v33 = vld [vmem:[%s0 + $0x38] sm:$0xff]
  %v34 = vld [vmem:[%s0 + $0x40] sm:$0xff]
  %v35 = vld [vmem:[%s0 + $0x48] sm:$0xff]
  %v36 = vld [vmem:[%s0 + $0x50] sm:$0xff]
  %v37 = vld [vmem:[%s0 + $0x58] sm:$0xff]
  %v38 = vld [vmem:[%s0 + $0x60] sm:$0xff]
  %v39 = vld [vmem:[%s0 + $0x68] sm:$0xff]
  %v40 = vld [vmem:[%s0 + $0x70] sm:$0xff]
  %v41 = vld [vmem:[%s0 + $0x78] sm:$0xff]
  %v42 = vld [vmem:[%s0 + $0x80] sm:$0xff]
  %v43 = vld [vmem:[%s0 + $0x88] sm:$0xff]
  %v44 = vld [vmem:[%s0 + $0x90] sm:$0xff]
  %v45 = vld [vmem:[%s0 + $0x98] sm:$0xff]
  %v46 = vld [vmem:[%s0 + $0xa0] sm:$0xff]
  %v47 = vld [vmem:[%s0 + $0xa8] sm:$0xff]
  %v48 = vld [vmem:[%s0 + $0xb0] sm:$0xff]
  %v49 = vld [vmem:[%s0 + $0xb8] sm:$0xff]
  %v50 = vld [vmem:[%s0 + $0xc0] sm:$0xff]
  %v51 = vld [vmem:[%s0 + $0xc8] sm:$0xff]
  %v52 = vld [vmem:[%s0 + $0xd0] sm:$0xff]
  %v53 = vld [vmem:[%s0 + $0xd8] sm:$0xff]
  %v54 = vld [vmem:[%s0 + $0xe0] sm:$0xff]
  %v55 = vld [vmem:[%s0 + $0xe8] sm:$0xff]
  %v56 = vld [vmem:[%s0 + $0xf0] sm:$0xff]
  %v57 = vld [vmem:[%s0 + $0xf8] sm:$0xff]
  %v58 = vld [vmem:[%s0 + $0x100] sm:$0xff]
  %v59 = vld [vmem:[%s0 + $0x108] sm:$0xff]
  %v60 = vld [vmem:[%s0 + $0x110] sm:$0xff]
  %v61 = vld [vmem:[%s0 + $0x118] sm:$0xff]
  %v62 = vld [vmem:[%s0 + $0x120] sm:$0xff]
  %v63 = vld [vmem:[%s0 + $0x128] sm:$0xff]
  %v64 = vld [vmem:[%s0 + $0x130] sm:$0xff]
  %v65 = vld [vmem:[%s0 + $0x138] sm:$0xff]
  %v66 = vld [vmem:[%s0 + $0x140] sm:$0xff]
  %v67 = vld [vmem:[%s0 + $0x148] sm:$0xff]
  %v68 = vld [vmem:[%s0 + $0x150] sm:$0xff]
  %v69 = vld [vmem:[%s0 + $0x158] sm:$0xff]
  %v70 = vld [vmem:[%s0 + $0x160] sm:$0xff]
  %v71 = vld [vmem:[%s0 + $0x168] sm:$0xff]
  %v72 = vld [vmem:[%s0 + $0x170] sm:$0xff]
  %v73 = vld [vmem:[%s0 + $0x178] sm:$0xff]
  %v74 = vld [vmem:[%s0 + $0x180] sm:$0xff]
  %v75 = vld [vmem:[%s0 + $0x188] sm:$0xff]
  %v76 = vld [vmem:[%s0 + $0x190] sm:$0xff]
  %v77 = vld [vmem:[%s0 + $0x198] sm:$0xff]
  %v78 = vld [vmem:[%s0 + $0x1a0] sm:$0xff]
  %v79 = vld [vmem:[%s0 + $0x1a8] sm:$0xff]
  %v80 = vld [vmem:[%s0 + $0x1b0] sm:$0xff]
  %v81 = vld [vmem:[%s0 + $0x1b8] sm:$0xff]
  %v82 = vld [vmem:[%s0 + $0x1c0] sm:$0xff]
  %v83 = vld [vmem:[%s0 + $0x1c8] sm:$0xff]
  %v84 = vld [vmem:[%s0 + $0x1d0] sm:$0xff]
  %v85 = vld [vmem:[%s0 + $0x1d8] sm:$0xff]
  %v86 = vld [vmem:[%s0 + $0x1e0] sm:$0xff]
  %v87 = vld [vmem:[%s0 + $0x1e8] sm:$0xff]
  %v88 = vld [vmem:[%s0 + $0x1f0] sm:$0xff]
  %v89 = vld [vmem:[%s0 + $0x1f8] sm:$0xff]
  %v90 = vld [vmem:[%s0 + $0x200] sm:$0xff]
  %v91 = vld [vmem:[%s0 + $0x208] sm:$0xff]
  %v92 = vld [vmem:[%s0 + $0x210] sm:$0xff]
  %v93 = vld [vmem:[%s0 + $0x218] sm:$0xff]
  %v94 = vld [vmem:[%s0 + $0x220] sm:$0xff]
  %v95 = vld [vmem:[%s0 + $0x228] sm:$0xff]
  %v96 = vld [vmem:[%s0 + $0x230] sm:$0xff]
  %v97 = vld [vmem:[%s0 + $0x238] sm:$0xff]
  %v98 = vld [vmem:[%s2] sm:$0xff]
  %v99 = vld [vmem:[%s2 + $0x8] sm:$0xff]
  %v100 = vld [vmem:[%s2 + $0x10] sm:$0xff]
  %v101 = vld [vmem:[%s2 + $0x18] sm:$0xff]
  %103 = vset.pattern.permute.xlu0 32
  %104 = vperm.xlu0 %103, %v98
  %v105 = vpop.permute.xlu0 %104
  %108 = vset.pattern.permute.xlu0 32
  %109 = vperm.xlu0 %108, %v99
  %v110 = vpop.permute.xlu0 %109
  %113 = vset.pattern.permute.xlu0 32
  %114 = vperm.xlu0 %113, %v100
  %v115 = vpop.permute.xlu0 %114
  %118 = vset.pattern.permute.xlu0 32
  %119 = vperm.xlu0 %118, %v101
  %v120 = vpop.permute.xlu0 %119
  %vm122 = vcmask 261120
  %v124 = vsel %vm122, %v16, 0
  %v127 = vsel %vm122, %v19, 0
  %v130 = vsel %vm122, %v22, 0
  %v133 = vsel %vm122, %v25, 0
  %135 = vmatpush.msra.mxu0 %v56
  %136 = vmatpush.msra.mxu0 %v54
  %137 = vmatpush.msra.mxu0 %v52
  %138 = vmatpush.msra.mxu0 %v50
  %139 = vmatpush.msra.mxu0 %v48
  %140 = vmatpush.msra.mxu0 %v46
  %141 = vmatpush.msra.mxu0 %v44
  %142 = vmatpush.msra.mxu0 %v42
  %143 = vmatpush.msra.mxu0 %v40
  %144 = vmatpush.msra.mxu0 %v38
  %145 = vmatpush.msra.mxu0 %v36
  %146 = vmatpush.msra.mxu0 %v34
  %147 = vmatpush.msra.mxu0 %v32
  %148 = vmatpush.msra.mxu0 %v30
  %149 = vmatpush.msra.mxu0 %v28
  %150 = vmatpush.msra.mxu0 %v26
  %151 = vmatmul.f32.gmra.mxu0 %v14
  %v152 = vpop.f32.mrf.mxu0
  %v153 = vadd.f32 %v105, %v152
  %154 = vmatmul.f32.gmra.mxu0 %v17
  %v155 = vpop.f32.mrf.mxu0
  %v156 = vadd.f32 %v110, %v155
  %157 = vmatmul.f32.gmra.mxu0 %v20
  %v158 = vpop.f32.mrf.mxu0
  %v159 = vadd.f32 %v115, %v158
  %160 = vmatmul.f32.gmra.mxu0 %v23
  %v161 = vpop.f32.mrf.mxu0
  %v162 = vadd.f32 %v120, %v161
  %163 = vdwg.mxu0
  %164 = vmatpush.msra.mxu0 %v88
  %165 = vmatpush.msra.mxu0 %v86
  %166 = vmatpush.msra.mxu0 %v84
  %167 = vmatpush.msra.mxu0 %v82
  %168 = vmatpush.msra.mxu0 %v80
  %169 = vmatpush.msra.mxu0 %v78
  %170 = vmatpush.msra.mxu0 %v76
  %171 = vmatpush.msra.mxu0 %v74
  %172 = vmatpush.msra.mxu0 %v72
  %173 = vmatpush.msra.mxu0 %v70
  %174 = vmatpush.msra.mxu0 %v68
  %175 = vmatpush.msra.mxu0 %v66
  %176 = vmatpush.msra.mxu0 %v64
  %177 = vmatpush.msra.mxu0 %v62
  %178 = vmatpush.msra.mxu0 %v60
  %179 = vmatpush.msra.mxu0 %v58
  %180 = vmatmul.f32.gmra.mxu0 %v15
  %v181 = vpop.f32.mrf.mxu0
  %v182 = vadd.f32 %v153, %v181
  %183 = vmatmul.f32.gmra.mxu0 %v18
  %v184 = vpop.f32.mrf.mxu0
  %v185 = vadd.f32 %v156, %v184
  %186 = vmatmul.f32.gmra.mxu0 %v21
  %v187 = vpop.f32.mrf.mxu0
  %v188 = vadd.f32 %v159, %v187
  %189 = vmatmul.f32.gmra.mxu0 %v24
  %v190 = vpop.f32.mrf.mxu0
  %v191 = vadd.f32 %v162, %v190
  %192 = vdwg.mxu0
  %193 = vmatpush.msra.mxu0 0.0
  %194 = vmatpush.msra.mxu0 0.0
  %195 = vmatpush.msra.mxu0 0.0
  %196 = vmatpush.msra.mxu0 0.0
  %197 = vmatpush.msra.mxu0 0.0
  %198 = vmatpush.msra.mxu0 0.0
  %199 = vmatpush.msra.mxu0 0.0
  %200 = vmatpush.msra.mxu0 0.0
  %201 = vmatpush.msra.mxu0 0.0
  %202 = vmatpush.msra.mxu0 0.0
  %203 = vmatpush.msra.mxu0 0.0
  %204 = vmatpush.msra.mxu0 0.0
  %205 = vmatpush.msra.mxu0 %v96
  %206 = vmatpush.msra.mxu0 %v94
  %207 = vmatpush.msra.mxu0 %v92
  %208 = vmatpush.msra.mxu0 %v90
  %209 = vmatmul.f32.gmra.mxu0 %v124
  %v210 = vpop.f32.mrf.mxu0
  %v211 = vadd.f32 %v182, %v210
  %212 = vmatmul.f32.gmra.mxu0 %v127
  %v213 = vpop.f32.mrf.mxu0
  %v214 = vadd.f32 %v185, %v213
  %215 = vmatmul.f32.gmra.mxu0 %v130
  %v216 = vpop.f32.mrf.mxu0
  %v217 = vadd.f32 %v188, %v216
  %218 = vmatmul.f32.gmra.mxu0 %v133
  %v219 = vpop.f32.mrf.mxu0
  %v220 = vadd.f32 %v191, %v219
  %221 = vdwg.mxu0
  %222 = vmatpush.msra.mxu0 %v57
  %223 = vmatpush.msra.mxu0 %v55
  %224 = vmatpush.msra.mxu0 %v53
  %225 = vmatpush.msra.mxu0 %v51
  %226 = vmatpush.msra.mxu0 %v49
  %227 = vmatpush.msra.mxu0 %v47
  %228 = vmatpush.msra.mxu0 %v45
  %229 = vmatpush.msra.mxu0 %v43
  %230 = vmatpush.msra.mxu0 %v41
  %231 = vmatpush.msra.mxu0 %v39
  %232 = vmatpush.msra.mxu0 %v37
  %233 = vmatpush.msra.mxu0 %v35
  %234 = vmatpush.msra.mxu0 %v33
  %235 = vmatpush.msra.mxu0 %v31
  %236 = vmatpush.msra.mxu0 %v29
  %237 = vmatpush.msra.mxu0 %v27
  %238 = vmatmul.f32.gmra.mxu0 %v14
  %v239 = vpop.f32.mrf.mxu0
  %v240 = vadd.f32 %v105, %v239
  %241 = vmatmul.f32.gmra.mxu0 %v17
  %v242 = vpop.f32.mrf.mxu0
  %v243 = vadd.f32 %v110, %v242
  %244 = vmatmul.f32.gmra.mxu0 %v20
  %v245 = vpop.f32.mrf.mxu0
  %v246 = vadd.f32 %v115, %v245
  %247 = vmatmul.f32.gmra.mxu0 %v23
  %v248 = vpop.f32.mrf.mxu0
  %v249 = vadd.f32 %v120, %v248
  %250 = vdwg.mxu0
  %251 = vmatpush.msra.mxu0 %v89
  %252 = vmatpush.msra.mxu0 %v87
  %253 = vmatpush.msra.mxu0 %v85
  %254 = vmatpush.msra.mxu0 %v83
  %255 = vmatpush.msra.mxu0 %v81
  %256 = vmatpush.msra.mxu0 %v79
  %257 = vmatpush.msra.mxu0 %v77
  %258 = vmatpush.msra.mxu0 %v75
  %259 = vmatpush.msra.mxu0 %v73
  %260 = vmatpush.msra.mxu0 %v71
  %261 = vmatpush.msra.mxu0 %v69
  %262 = vmatpush.msra.mxu0 %v67
  %263 = vmatpush.msra.mxu0 %v65
  %264 = vmatpush.msra.mxu0 %v63
  %265 = vmatpush.msra.mxu0 %v61
  %266 = vmatpush.msra.mxu0 %v59
  %267 = vmatmul.f32.gmra.mxu0 %v15
  %v268 = vpop.f32.mrf.mxu0
  %v269 = vadd.f32 %v240, %v268
  %270 = vmatmul.f32.gmra.mxu0 %v18
  %v271 = vpop.f32.mrf.mxu0
  %v272 = vadd.f32 %v243, %v271
  %273 = vmatmul.f32.gmra.mxu0 %v21
  %v274 = vpop.f32.mrf.mxu0
  %v275 = vadd.f32 %v246, %v274
  %276 = vmatmul.f32.gmra.mxu0 %v24
  %v277 = vpop.f32.mrf.mxu0
  %v278 = vadd.f32 %v249, %v277
  %279 = vdwg.mxu0
  %280 = vmatpush.msra.mxu0 0.0
  %281 = vmatpush.msra.mxu0 0.0
  %282 = vmatpush.msra.mxu0 0.0
  %283 = vmatpush.msra.mxu0 0.0
  %284 = vmatpush.msra.mxu0 0.0
  %285 = vmatpush.msra.mxu0 0.0
  %286 = vmatpush.msra.mxu0 0.0
  %287 = vmatpush.msra.mxu0 0.0
  %288 = vmatpush.msra.mxu0 0.0
  %289 = vmatpush.msra.mxu0 0.0
  %290 = vmatpush.msra.mxu0 0.0
  %291 = vmatpush.msra.mxu0 0.0
  %292 = vmatpush.msra.mxu0 %v97
  %293 = vmatpush.msra.mxu0 %v95
  %294 = vmatpush.msra.mxu0 %v93
  %295 = vmatpush.msra.mxu0 %v91
  %296 = vmatmul.f32.gmra.mxu0 %v124
  %v297 = vpop.f32.mrf.mxu0
  %v298 = vadd.f32 %v269, %v297
  %299 = vmatmul.f32.gmra.mxu0 %v127
  %v300 = vpop.f32.mrf.mxu0
  %v301 = vadd.f32 %v272, %v300
  %302 = vmatmul.f32.gmra.mxu0 %v130
  %v303 = vpop.f32.mrf.mxu0
  %v304 = vadd.f32 %v275, %v303
  %305 = vmatmul.f32.gmra.mxu0 %v133
  %v306 = vpop.f32.mrf.mxu0
  %v307 = vadd.f32 %v278, %v306
  %308 = vdwg.mxu0
  %vm309 = vcmp.gt.f32.partialorder %v211, 0.0
  %vm310 = vcmp.gt.f32.partialorder %v298, 0.0
  %vm311 = vcmp.gt.f32.partialorder %v214, 0.0
  %vm312 = vcmp.gt.f32.partialorder %v301, 0.0
  %vm313 = vcmp.gt.f32.partialorder %v217, 0.0
  %vm314 = vcmp.gt.f32.partialorder %v304, 0.0
  %vm315 = vcmp.gt.f32.partialorder %v220, 0.0
  %vm316 = vcmp.gt.f32.partialorder %v307, 0.0
  %v317 = vmul.f32 %v211, 1.442695
  %v318 = vpow.pop %v317
  %v319 = vmul.f32 %v298, 1.442695
  %v320 = vpow.pop %v319
  %v321 = vmul.f32 %v214, 1.442695
  %v322 = vpow.pop %v321
  %v323 = vmul.f32 %v301, 1.442695
  %v324 = vpow.pop %v323
  %v325 = vmul.f32 %v217, 1.442695
  %v326 = vpow.pop %v325
  %v327 = vmul.f32 %v304, 1.442695
  %v328 = vpow.pop %v327
  %v329 = vmul.f32 %v220, 1.442695
  %v330 = vpow.pop %v329
  %v331 = vmul.f32 %v307, 1.442695
  %v332 = vpow.pop %v331
  %v333 = vsub.f32 %v318, 1.0
  %v334 = vsub.f32 %v320, 1.0
  %v335 = vsub.f32 %v322, 1.0
  %v336 = vsub.f32 %v324, 1.0
  %v337 = vsub.f32 %v326, 1.0
  %v338 = vsub.f32 %v328, 1.0
  %v339 = vsub.f32 %v330, 1.0
  %v340 = vsub.f32 %v332, 1.0
  %v341 = vsel %vm309, %v211, %v333
  %v342 = vsel %vm310, %v298, %v334
  %v343 = vsel %vm311, %v214, %v335
  %v344 = vsel %vm312, %v301, %v336
  %v345 = vsel %vm313, %v217, %v337
  %v346 = vsel %vm314, %v304, %v338
  %v347 = vsel %vm315, %v220, %v339
  %v348 = vsel %vm316, %v307, %v340
  %349 = vset.pattern.permute.xlu0 33
  %350 = vperm.xlu0 %349, %v98
  %v351 = vpop.permute.xlu0 %350
  %353 = vset.pattern.permute.xlu0 33
  %354 = vperm.xlu0 %353, %v99
  %v355 = vpop.permute.xlu0 %354
  %357 = vset.pattern.permute.xlu0 33
  %358 = vperm.xlu0 %357, %v100
  %v359 = vpop.permute.xlu0 %358
  %361 = vset.pattern.permute.xlu0 33
  %362 = vperm.xlu0 %361, %v101
  %v363 = vpop.permute.xlu0 %362
  %v365 = vsel %vm122, %v98, 0
  %v367 = vsel %vm122, %v99, 0
  %v369 = vsel %vm122, %v100, 0
  %v371 = vsel %vm122, %v101, 0
  %373 = vmatpush.msra.mxu0 0.0
  %374 = vmatpush.msra.mxu0 0.0
  %375 = vmatpush.msra.mxu0 0.0
  %376 = vmatpush.msra.mxu0 0.0
  %377 = vmatpush.msra.mxu0 0.0
  %378 = vmatpush.msra.mxu0 0.0
  %379 = vmatpush.msra.mxu0 0.0
  %380 = vmatpush.msra.mxu0 0.0
  %381 = vmatpush.msra.mxu0 0.0
  %382 = vmatpush.msra.mxu0 0.0
  %383 = vmatpush.msra.mxu0 0.0
  %384 = vmatpush.msra.mxu0 0.0
  %385 = vmatpush.msra.mxu0 %v347
  %386 = vmatpush.msra.mxu0 %v345
  %387 = vmatpush.msra.mxu0 %v343
  %388 = vmatpush.msra.mxu0 %v341
  %389 = vmatmul.f32.gmra.mxu0 %v365
  %v390 = vpop.f32.mrf.mxu0
  %v391 = vadd.f32 %v351, %v390
  %392 = vmatmul.f32.gmra.mxu0 %v367
  %v393 = vpop.f32.mrf.mxu0
  %v394 = vadd.f32 %v355, %v393
  %395 = vmatmul.f32.gmra.mxu0 %v369
  %v396 = vpop.f32.mrf.mxu0
  %v397 = vadd.f32 %v359, %v396
  %398 = vmatmul.f32.gmra.mxu0 %v371
  %v399 = vpop.f32.mrf.mxu0
  %v400 = vadd.f32 %v363, %v399
  %401 = vdwg.mxu0
  %402 = vmatpush.msra.mxu0 0.0
  %403 = vmatpush.msra.mxu0 0.0
  %404 = vmatpush.msra.mxu0 0.0
  %405 = vmatpush.msra.mxu0 0.0
  %406 = vmatpush.msra.mxu0 0.0
  %407 = vmatpush.msra.mxu0 0.0
  %408 = vmatpush.msra.mxu0 0.0
  %409 = vmatpush.msra.mxu0 0.0
  %410 = vmatpush.msra.mxu0 0.0
  %411 = vmatpush.msra.mxu0 0.0
  %412 = vmatpush.msra.mxu0 0.0
  %413 = vmatpush.msra.mxu0 0.0
  %414 = vmatpush.msra.mxu0 %v348
  %415 = vmatpush.msra.mxu0 %v346
  %416 = vmatpush.msra.mxu0 %v344
  %417 = vmatpush.msra.mxu0 %v342
  %418 = vmatmul.f32.gmra.mxu0 %v365
  %v419 = vpop.f32.mrf.mxu0
  %v420 = vadd.f32 %v351, %v419
  %421 = vmatmul.f32.gmra.mxu0 %v367
  %v422 = vpop.f32.mrf.mxu0
  %v423 = vadd.f32 %v355, %v422
  %424 = vmatmul.f32.gmra.mxu0 %v369
  %v425 = vpop.f32.mrf.mxu0
  %v426 = vadd.f32 %v359, %v425
  %427 = vmatmul.f32.gmra.mxu0 %v371
  %v428 = vpop.f32.mrf.mxu0
  %v429 = vadd.f32 %v363, %v428
  %430 = vdwg.mxu0
  %vm431 = vcmp.gt.f32.partialorder %v391, 0.0
  %vm432 = vcmp.gt.f32.partialorder %v420, 0.0
  %vm433 = vcmp.gt.f32.partialorder %v394, 0.0
  %vm434 = vcmp.gt.f32.partialorder %v423, 0.0
  %vm435 = vcmp.gt.f32.partialorder %v397, 0.0
  %vm436 = vcmp.gt.f32.partialorder %v426, 0.0
  %vm437 = vcmp.gt.f32.partialorder %v400, 0.0
  %vm438 = vcmp.gt.f32.partialorder %v429, 0.0
  %v439 = vmul.f32 %v391, 1.442695
  %v440 = vpow.pop %v439
  %v441 = vmul.f32 %v420, 1.442695
  %v442 = vpow.pop %v441
  %v443 = vmul.f32 %v394, 1.442695
  %v444 = vpow.pop %v443
  %v445 = vmul.f32 %v423, 1.442695
  %v446 = vpow.pop %v445
  %v447 = vmul.f32 %v397, 1.442695
  %v448 = vpow.pop %v447
  %v449 = vmul.f32 %v426, 1.442695
  %v450 = vpow.pop %v449
  %v451 = vmul.f32 %v400, 1.442695
  %v452 = vpow.pop %v451
  %v453 = vmul.f32 %v429, 1.442695
  %v454 = vpow.pop %v453
  %v455 = vsub.f32 %v440, 1.0
  %v456 = vsub.f32 %v442, 1.0
  %v457 = vsub.f32 %v444, 1.0
  %v458 = vsub.f32 %v446, 1.0
  %v459 = vsub.f32 %v448, 1.0
  %v460 = vsub.f32 %v450, 1.0
  %v461 = vsub.f32 %v452, 1.0
  %v462 = vsub.f32 %v454, 1.0
  %v463 = vsel %vm431, %v391, %v455
  %v464 = vsel %vm432, %v420, %v456
  %v465 = vsel %vm433, %v394, %v457
  %v466 = vsel %vm434, %v423, %v458
  %v467 = vsel %vm435, %v397, %v459
  %v468 = vsel %vm436, %v426, %v460
  %v469 = vsel %vm437, %v400, %v461
  %v470 = vsel %vm438, %v429, %v462
  %v471 = vld [vmem:[%s0 + $0x100] sm:$0xff]
  %v472 = vld [vmem:[%s0 + $0x108] sm:$0xff]
  %v473 = vld [vmem:[%s0 + $0x110] sm:$0xff]
  %v474 = vld [vmem:[%s0 + $0x118] sm:$0xff]
  %v475 = vld [vmem:[%s0 + $0x120] sm:$0xff]
  %v476 = vld [vmem:[%s0 + $0x128] sm:$0xff]
  %v477 = vld [vmem:[%s0 + $0x130] sm:$0xff]
  %v478 = vld [vmem:[%s0 + $0x138] sm:$0xff]
  %v479 = vadd.f32 %v463, %v471
  %v480 = vadd.f32 %v464, %v472
  %v481 = vadd.f32 %v465, %v473
  %v482 = vadd.f32 %v466, %v474
  %v483 = vadd.f32 %v467, %v475
  %v484 = vadd.f32 %v468, %v476
  %v485 = vadd.f32 %v469, %v477
  %v486 = vadd.f32 %v470, %v478
  %487 = vset.pattern.permute.xlu0 34
  %488 = vperm.xlu0 %487, %v98
  %v489 = vpop.permute.xlu0 %488
  %491 = vset.pattern.permute.xlu0 34
  %492 = vperm.xlu0 %491, %v99
  %v493 = vpop.permute.xlu0 %492
  %495 = vset.pattern.permute.xlu0 34
  %496 = vperm.xlu0 %495, %v100
  %v497 = vpop.permute.xlu0 %496
  %499 = vset.pattern.permute.xlu0 34
  %500 = vperm.xlu0 %499, %v101
  %v501 = vpop.permute.xlu0 %500
  %v503 = vmul.f32 %v479, %v489
  %v504 = vmul.f32 %v480, %v489
  %v505 = vmul.f32 %v481, %v493
  %v506 = vmul.f32 %v482, %v493
  %v507 = vmul.f32 %v483, %v497
  %v508 = vmul.f32 %v484, %v497
  %v509 = vmul.f32 %v485, %v501
  %v510 = vmul.f32 %v486, %v501
  %511 = vset.pattern.permute.xlu0 35
  %512 = vperm.xlu0 %511, %v98
  %v513 = vpop.permute.xlu0 %512
  %515 = vset.pattern.permute.xlu0 35
  %516 = vperm.xlu0 %515, %v99
  %v517 = vpop.permute.xlu0 %516
  %519 = vset.pattern.permute.xlu0 35
  %520 = vperm.xlu0 %519, %v100
  %v521 = vpop.permute.xlu0 %520
  %523 = vset.pattern.permute.xlu0 35
  %524 = vperm.xlu0 %523, %v101
  %v525 = vpop.permute.xlu0 %524
  %v527 = vadd.f32 %v503, %v513
  %v528 = vadd.f32 %v504, %v513
  %v529 = vadd.f32 %v505, %v517
  %v530 = vadd.f32 %v506, %v517
  %v531 = vadd.f32 %v507, %v521
  %v532 = vadd.f32 %v508, %v521
  %v533 = vadd.f32 %v509, %v525
  %v534 = vadd.f32 %v510, %v525
  %535 = vst [vmem:[%s3] sm:$0xff] %v527
  %536 = vst [vmem:[%s3 + $0x8] sm:$0xff] %v528
  %537 = vst [vmem:[%s3 + $0x10] sm:$0xff] %v529
  %538 = vst [vmem:[%s3 + $0x18] sm:$0xff] %v530
  %539 = vst [vmem:[%s3 + $0x20] sm:$0xff] %v531
  %540 = vst [vmem:[%s3 + $0x28] sm:$0xff] %v532
  %541 = vst [vmem:[%s3 + $0x30] sm:$0xff] %v533
  %542 = vst [vmem:[%s3 + $0x38] sm:$0xff] %v534
  // Predicated region
  $region14: #{ffn_forward.1} parent=0 // pred_check
    _
  $region15: #{ffn_forward.1} parent=0 // pred_check_branch
    %544 = sbr.rel (0) target = $region17
  $region16: #{ffn_forward.1} parent=0 // pred_region
    _
  $region17: #{ffn_forward.1} parent=0 // pred_fallthru
    _
  // Predicated region
  $region18: #{ffn_forward.1} parent=0 // pred_check
    _
  $region19: #{ffn_forward.1} parent=0 // pred_check_branch
    %546 = sbr.rel (0) target = $region21
  $region20: #{ffn_forward.1} parent=0 // pred_region
    _
  $region21: #{ffn_forward.1} parent=0 // pred_fallthru
    _

</llo_original>
